<compile_context>
chip_gen: v5e
topology: v5e:2x2
jax: 0.10.0
libtpu: 0.0.40
codegen_flags: <defaults>
</compile_context>

<pallas_src>
import jax
import jax.numpy as jnp
from jax.experimental import pallas as pl
from jax.experimental.pallas import tpu as pltpu


def _mlp_kernel(x_ref,
                w1_ref, b1_ref,
                w2_ref, b2_ref,
                w3_ref, b3_ref,
                w4_ref, b4_ref,
                w5_ref, b5_ref,
                o_ref):
    # x tile is bf16 [bm, 260]; weights are bf16 [in, out]; biases f32 [1, out].
    h = x_ref[...]

    def layer(h_lo, w_ref, b_ref):
        # bf16 x bf16 -> f32 accumulate on the MXU.
        y = jnp.dot(h_lo, w_ref[...], preferred_element_type=jnp.float32)
        # bias-add + ReLU in f32 on the VPU ([1, out] broadcasts over rows).
        return jnp.maximum(y + b_ref[...], 0.0)

    h = layer(h, w1_ref, b1_ref).astype(jnp.bfloat16)
    h = layer(h, w2_ref, b2_ref).astype(jnp.bfloat16)
    h = layer(h, w3_ref, b3_ref).astype(jnp.bfloat16)
    h = layer(h, w4_ref, b4_ref).astype(jnp.bfloat16)
    h = layer(h, w5_ref, b5_ref)          # final layer result kept in f32
    o_ref[...] = h.astype(o_ref.dtype)


def classifier_forward(x, params, *, block_rows=1024):
    """x: [B, 260] float32. params: list of (W[in, out], b[1, out]) per layer.

    Returns [B, 32] float32 (ReLU(fc5(...ReLU(fc1(x))...))).
    """
    B, d_in = x.shape
    bm = min(block_rows, B)
    grid = (pl.cdiv(B, bm),)

    # Inputs / weights in bf16 for the MXU fast path (f32 accumulation inside).
    flat = [x.astype(jnp.bfloat16)]
    in_specs = [pl.BlockSpec((bm, d_in), lambda i: (i, 0))]
    for w, b in params:
        wi, wo = w.shape
        flat.append(w.astype(jnp.bfloat16))
        in_specs.append(pl.BlockSpec((wi, wo), lambda i: (0, 0)))   # VMEM-resident
        flat.append(b.astype(jnp.float32))
        in_specs.append(pl.BlockSpec((1, wo), lambda i: (0, 0)))    # VMEM-resident

    out_dim = params[-1][0].shape[1]

    flops = 2 * B * sum(w.shape[0] * w.shape[1] for w, _ in params)
    bytes_accessed = (
        B * d_in * 2                                   # x (bf16)
        + B * out_dim * 4                              # output (f32)
        + sum(w.size * 2 + b.size * 4 for w, b in params)
    )

    return pl.pallas_call(
        _mlp_kernel,
        out_shape=jax.ShapeDtypeStruct((B, out_dim), jnp.float32),
        grid=grid,
        in_specs=in_specs,
        out_specs=pl.BlockSpec((bm, out_dim), lambda i: (i, 0)),
        compiler_params=pltpu.CompilerParams(
            dimension_semantics=("parallel",)),
        cost_estimate=pl.CostEstimate(
            flops=flops, transcendentals=0, bytes_accessed=bytes_accessed),
    )(*flat)


def init_params(key):
    """Deterministic init mimicking nn.Linear default U(-1/sqrt(fan_in), +1/sqrt(fan_in)).

    Weights returned already transposed to [in, out]; biases as [1, out]."""
    dims = [(260, 256), (256, 128), (128, 64), (64, 32), (32, 32)]
    params = []
    for (fan_in, fan_out) in dims:
        key, kw, kb = jax.random.split(key, 3)
        bound = 1.0 / jnp.sqrt(jnp.float32(fan_in))
        w = jax.random.uniform(kw, (fan_in, fan_out), jnp.float32, -bound, bound)
        b = jax.random.uniform(kb, (1, fan_out), jnp.float32, -bound, bound)
        params.append((w, b))
    return params


def classifier_ref(x, params):
    """Pure-JAX f32 reference for validation."""
    h = x
    for w, b in params:
        h = jnp.maximum(h @ w + b, 0.0)
    return h


if __name__ == "__main__":
    key = jax.random.PRNGKey(0)
    key, kx = jax.random.split(key)

    B = 64
    x = jax.random.normal(kx, (B, 260), jnp.float32)
    params = init_params(key)

    # Small block_rows so the batch grid (and weight residency across steps)
    # is actually exercised: grid = (4,).
    out = classifier_forward(x, params, block_rows=16)
    out = jax.block_until_ready(out)

    ref = classifier_ref(x, params)
    assert out.shape == (B, 32), out.shape
    # bf16 MXU inputs with f32 accumulation -> loosened tolerances vs f32 ref.
    assert jnp.allclose(out, ref, atol=5e-2, rtol=5e-2), (
        "mismatch vs JAX reference, max abs diff = "
        f"{float(jnp.max(jnp.abs(out - ref)))}")

    print("KERNEL_OK")
</pallas_src>

<mosaic_0001>
module attributes {stable_mosaic.version = 11 : i64} {
  func.func @_mlp_kernel(%arg0: i32, %arg1: memref<16x260xbf16, #tpu.memory_space<vmem>>, %arg2: memref<260x256xbf16, #tpu.memory_space<vmem>>, %arg3: memref<1x256xf32, #tpu.memory_space<vmem>>, %arg4: memref<256x128xbf16, #tpu.memory_space<vmem>>, %arg5: memref<1x128xf32, #tpu.memory_space<vmem>>, %arg6: memref<128x64xbf16, #tpu.memory_space<vmem>>, %arg7: memref<1x64xf32, #tpu.memory_space<vmem>>, %arg8: memref<64x32xbf16, #tpu.memory_space<vmem>>, %arg9: memref<1x32xf32, #tpu.memory_space<vmem>>, %arg10: memref<32x32xbf16, #tpu.memory_space<vmem>>, %arg11: memref<1x32xf32, #tpu.memory_space<vmem>>, %arg12: memref<16x32xf32, #tpu.memory_space<vmem>>) attributes {dimension_semantics = [#tpu.dimension_semantics<parallel>], iteration_bounds = array<i64: 4>, scalar_prefetch = 0 : i64, scratch_operands = 0 : i64, tpu.core_type = #tpu.core_type<tc>, window_params = [{transform_indices = @transform_0, window_bounds = array<i64: 16, 260>}, {pipeline_mode = #tpu.pipeline_mode<synchronous>, transform_indices = @transform_1, window_bounds = array<i64: 260, 256>}, {pipeline_mode = #tpu.pipeline_mode<synchronous>, transform_indices = @transform_2, window_bounds = array<i64: 1, 256>}, {pipeline_mode = #tpu.pipeline_mode<synchronous>, transform_indices = @transform_3, window_bounds = array<i64: 256, 128>}, {pipeline_mode = #tpu.pipeline_mode<synchronous>, transform_indices = @transform_4, window_bounds = array<i64: 1, 128>}, {pipeline_mode = #tpu.pipeline_mode<synchronous>, transform_indices = @transform_5, window_bounds = array<i64: 128, 64>}, {pipeline_mode = #tpu.pipeline_mode<synchronous>, transform_indices = @transform_6, window_bounds = array<i64: 1, 64>}, {pipeline_mode = #tpu.pipeline_mode<synchronous>, transform_indices = @transform_7, window_bounds = array<i64: 64, 32>}, {pipeline_mode = #tpu.pipeline_mode<synchronous>, transform_indices = @transform_8, window_bounds = array<i64: 1, 32>}, {pipeline_mode = #tpu.pipeline_mode<synchronous>, transform_indices = @transform_9, window_bounds = array<i64: 32, 32>}, {pipeline_mode = #tpu.pipeline_mode<synchronous>, transform_indices = @transform_10, window_bounds = array<i64: 1, 32>}, {transform_indices = @transform_11, window_bounds = array<i64: 16, 32>}]} {
    %c0 = arith.constant 0 : index
    %c0_0 = arith.constant 0 : index
    %0 = vector.load %arg1[%c0, %c0_0] : memref<16x260xbf16, #tpu.memory_space<vmem>>, vector<16x260xbf16>
    %c0_1 = arith.constant 0 : index
    %c0_2 = arith.constant 0 : index
    %1 = vector.load %arg2[%c0_1, %c0_2] : memref<260x256xbf16, #tpu.memory_space<vmem>>, vector<260x256xbf16>
    %cst = arith.constant dense<0.000000e+00> : vector<16x256xf32>
    %2 = tpu.matmul %0, %1, %cst {dimension_numbers = #tpu.dot_dimension_numbers<[1], [0], [0], [1], [0, 0, 1, 1], [], []>} : vector<16x260xbf16>, vector<260x256xbf16>, vector<16x256xf32> -> vector<16x256xf32>
    %c0_3 = arith.constant 0 : index
    %c0_4 = arith.constant 0 : index
    %3 = vector.load %arg3[%c0_3, %c0_4] : memref<1x256xf32, #tpu.memory_space<vmem>>, vector<1x256xf32>
    %4 = vector.broadcast %3 : vector<1x256xf32> to vector<16x256xf32>
    %5 = arith.addf %2, %4 : vector<16x256xf32>
    %cst_5 = arith.constant 0.000000e+00 : f32
    %6 = vector.broadcast %cst_5 : f32 to vector<16x256xf32>
    %7 = arith.maximumf %5, %6 : vector<16x256xf32>
    %8 = arith.truncf %7 : vector<16x256xf32> to vector<16x256xbf16>
    %c0_6 = arith.constant 0 : index
    %c0_7 = arith.constant 0 : index
    %9 = vector.load %arg4[%c0_6, %c0_7] : memref<256x128xbf16, #tpu.memory_space<vmem>>, vector<256x128xbf16>
    %cst_8 = arith.constant dense<0.000000e+00> : vector<16x128xf32>
    %10 = tpu.matmul %8, %9, %cst_8 {dimension_numbers = #tpu.dot_dimension_numbers<[1], [0], [0], [1], [0, 0, 1, 1], [], []>} : vector<16x256xbf16>, vector<256x128xbf16>, vector<16x128xf32> -> vector<16x128xf32>
    %c0_9 = arith.constant 0 : index
    %c0_10 = arith.constant 0 : index
    %11 = vector.load %arg5[%c0_9, %c0_10] : memref<1x128xf32, #tpu.memory_space<vmem>>, vector<1x128xf32>
    %12 = vector.broadcast %11 : vector<1x128xf32> to vector<16x128xf32>
    %13 = arith.addf %10, %12 : vector<16x128xf32>
    %cst_11 = arith.constant 0.000000e+00 : f32
    %14 = vector.broadcast %cst_11 : f32 to vector<16x128xf32>
    %15 = arith.maximumf %13, %14 : vector<16x128xf32>
    %16 = arith.truncf %15 : vector<16x128xf32> to vector<16x128xbf16>
    %c0_12 = arith.constant 0 : index
    %c0_13 = arith.constant 0 : index
    %17 = vector.load %arg6[%c0_12, %c0_13] : memref<128x64xbf16, #tpu.memory_space<vmem>>, vector<128x64xbf16>
    %cst_14 = arith.constant dense<0.000000e+00> : vector<16x64xf32>
    %18 = tpu.matmul %16, %17, %cst_14 {dimension_numbers = #tpu.dot_dimension_numbers<[1], [0], [0], [1], [0, 0, 1, 1], [], []>} : vector<16x128xbf16>, vector<128x64xbf16>, vector<16x64xf32> -> vector<16x64xf32>
    %c0_15 = arith.constant 0 : index
    %c0_16 = arith.constant 0 : index
    %19 = vector.load %arg7[%c0_15, %c0_16] : memref<1x64xf32, #tpu.memory_space<vmem>>, vector<1x64xf32>
    %20 = vector.broadcast %19 : vector<1x64xf32> to vector<16x64xf32>
    %21 = arith.addf %18, %20 : vector<16x64xf32>
    %cst_17 = arith.constant 0.000000e+00 : f32
    %22 = vector.broadcast %cst_17 : f32 to vector<16x64xf32>
    %23 = arith.maximumf %21, %22 : vector<16x64xf32>
    %24 = arith.truncf %23 : vector<16x64xf32> to vector<16x64xbf16>
    %c0_18 = arith.constant 0 : index
    %c0_19 = arith.constant 0 : index
    %25 = vector.load %arg8[%c0_18, %c0_19] : memref<64x32xbf16, #tpu.memory_space<vmem>>, vector<64x32xbf16>
    %cst_20 = arith.constant dense<0.000000e+00> : vector<16x32xf32>
    %26 = tpu.matmul %24, %25, %cst_20 {dimension_numbers = #tpu.dot_dimension_numbers<[1], [0], [0], [1], [0, 0, 1, 1], [], []>} : vector<16x64xbf16>, vector<64x32xbf16>, vector<16x32xf32> -> vector<16x32xf32>
    %c0_21 = arith.constant 0 : index
    %c0_22 = arith.constant 0 : index
    %27 = vector.load %arg9[%c0_21, %c0_22] : memref<1x32xf32, #tpu.memory_space<vmem>>, vector<1x32xf32>
    %28 = vector.broadcast %27 : vector<1x32xf32> to vector<16x32xf32>
    %29 = arith.addf %26, %28 : vector<16x32xf32>
    %cst_23 = arith.constant 0.000000e+00 : f32
    %30 = vector.broadcast %cst_23 : f32 to vector<16x32xf32>
    %31 = arith.maximumf %29, %30 : vector<16x32xf32>
    %32 = arith.truncf %31 : vector<16x32xf32> to vector<16x32xbf16>
    %c0_24 = arith.constant 0 : index
    %c0_25 = arith.constant 0 : index
    %33 = vector.load %arg10[%c0_24, %c0_25] : memref<32x32xbf16, #tpu.memory_space<vmem>>, vector<32x32xbf16>
    %cst_26 = arith.constant dense<0.000000e+00> : vector<16x32xf32>
    %34 = tpu.matmul %32, %33, %cst_26 {dimension_numbers = #tpu.dot_dimension_numbers<[1], [0], [0], [1], [0, 0, 1, 1], [], []>} : vector<16x32xbf16>, vector<32x32xbf16>, vector<16x32xf32> -> vector<16x32xf32>
    %c0_27 = arith.constant 0 : index
    %c0_28 = arith.constant 0 : index
    %35 = vector.load %arg11[%c0_27, %c0_28] : memref<1x32xf32, #tpu.memory_space<vmem>>, vector<1x32xf32>
    %36 = vector.broadcast %35 : vector<1x32xf32> to vector<16x32xf32>
    %37 = arith.addf %34, %36 : vector<16x32xf32>
    %cst_29 = arith.constant 0.000000e+00 : f32
    %38 = vector.broadcast %cst_29 : f32 to vector<16x32xf32>
    %39 = arith.maximumf %37, %38 : vector<16x32xf32>
    %c0_30 = arith.constant 0 : index
    %c0_31 = arith.constant 0 : index
    %40 = vector.load %arg12[%c0_30, %c0_31] : memref<16x32xf32, #tpu.memory_space<vmem>>, vector<16x32xf32>
    tpu.vector_store %arg12[%c0_30, %c0_31], %39 {strides = array<i32>} : memref<16x32xf32, #tpu.memory_space<vmem>>, vector<16x32xf32>,
    return
  }
  func.func @transform_0(%arg0: i32) -> (i32, i32) {
    %c0_i32 = arith.constant 0 : i32
    %c0_i32_0 = arith.constant 0 : i32
    return %arg0, %c0_i32 : i32, i32
  }
  func.func @transform_1(%arg0: i32) -> (i32, i32) {
    %c0_i32 = arith.constant 0 : i32
    %c0_i32_0 = arith.constant 0 : i32
    %c0_i32_1 = arith.constant 0 : i32
    return %c0_i32, %c0_i32_0 : i32, i32
  }
  func.func @transform_2(%arg0: i32) -> (i32, i32) {
    %c0_i32 = arith.constant 0 : i32
    %c0_i32_0 = arith.constant 0 : i32
    %c0_i32_1 = arith.constant 0 : i32
    return %c0_i32, %c0_i32_0 : i32, i32
  }
  func.func @transform_3(%arg0: i32) -> (i32, i32) {
    %c0_i32 = arith.constant 0 : i32
    %c0_i32_0 = arith.constant 0 : i32
    %c0_i32_1 = arith.constant 0 : i32
    return %c0_i32, %c0_i32_0 : i32, i32
  }
  func.func @transform_4(%arg0: i32) -> (i32, i32) {
    %c0_i32 = arith.constant 0 : i32
    %c0_i32_0 = arith.constant 0 : i32
    %c0_i32_1 = arith.constant 0 : i32
    return %c0_i32, %c0_i32_0 : i32, i32
  }
  func.func @transform_5(%arg0: i32) -> (i32, i32) {
    %c0_i32 = arith.constant 0 : i32
    %c0_i32_0 = arith.constant 0 : i32
    %c0_i32_1 = arith.constant 0 : i32
    return %c0_i32, %c0_i32_0 : i32, i32
  }
  func.func @transform_6(%arg0: i32) -> (i32, i32) {
    %c0_i32 = arith.constant 0 : i32
    %c0_i32_0 = arith.constant 0 : i32
    %c0_i32_1 = arith.constant 0 : i32
    return %c0_i32, %c0_i32_0 : i32, i32
  }
  func.func @transform_7(%arg0: i32) -> (i32, i32) {
    %c0_i32 = arith.constant 0 : i32
    %c0_i32_0 = arith.constant 0 : i32
    %c0_i32_1 = arith.constant 0 : i32
    return %c0_i32, %c0_i32_0 : i32, i32
  }
  func.func @transform_8(%arg0: i32) -> (i32, i32) {
    %c0_i32 = arith.constant 0 : i32
    %c0_i32_0 = arith.constant 0 : i32
    %c0_i32_1 = arith.constant 0 : i32
    return %c0_i32, %c0_i32_0 : i32, i32
  }
  func.func @transform_9(%arg0: i32) -> (i32, i32) {
    %c0_i32 = arith.constant 0 : i32
    %c0_i32_0 = arith.constant 0 : i32
    %c0_i32_1 = arith.constant 0 : i32
    return %c0_i32, %c0_i32_0 : i32, i32
  }
  func.func @transform_10(%arg0: i32) -> (i32, i32) {
    %c0_i32 = arith.constant 0 : i32
    %c0_i32_0 = arith.constant 0 : i32
    %c0_i32_1 = arith.constant 0 : i32
    return %c0_i32, %c0_i32_0 : i32, i32
  }
  func.func @transform_11(%arg0: i32) -> (i32, i32) {
    %c0_i32 = arith.constant 0 : i32
    %c0_i32_0 = arith.constant 0 : i32
    return %arg0, %c0_i32 : i32, i32
  }
}

</mosaic_0001>

<llo_original>
// kernel: tpu_custom_call.1
$region0: #{tpu_custom_call.1}
  #allocation0 [shape = 'u32[]', space=smem, size = 0x4, offset = 0x4, fixed_abs, tag = 'smem constant byte address 0x4 - core index']
  #allocation1 [shape = 'u32[72,128]{1,0:T(1,128)}', space=vmem, size = 0x9000, scoped, tag = 'internal scratch']
  %s0 = inlined_call_operand.hbm [shape: bf16[64,260], index: 0, kind: input, shape index: {}]
  %s1 = inlined_call_operand.hbm [shape: bf16[260,256], index: 1, kind: input, shape index: {}]
  %s2 = inlined_call_operand.vmem [shape: f32[1,256], index: 2, kind: input, shape index: {}]
  %s3 = inlined_call_operand.vmem [shape: bf16[256,128], index: 3, kind: input, shape index: {}]
  %s4 = inlined_call_operand.vmem [shape: f32[1,128], index: 4, kind: input, shape index: {}]
  %s5 = inlined_call_operand.vmem [shape: bf16[128,64], index: 5, kind: input, shape index: {}]
  %s6 = inlined_call_operand.vmem [shape: f32[1,64], index: 6, kind: input, shape index: {}]
  %s7 = inlined_call_operand.vmem [shape: bf16[64,32], index: 7, kind: input, shape index: {}]
  %s8 = inlined_call_operand.vmem [shape: f32[1,32], index: 8, kind: input, shape index: {}]
  %s9 = inlined_call_operand.vmem [shape: bf16[32,32], index: 9, kind: input, shape index: {}]
  %s10 = inlined_call_operand.vmem [shape: f32[1,32], index: 10, kind: input, shape index: {}]
  %s11 = inlined_call_operand.vmem [shape: f32[64,32], index: 11, kind: output, shape index: {}]
  %s12 = sld [smem:[#allocation0]]
  $region85: #{tpu_custom_call.1} parent=0
    _
  %s14 = ssub.s32 1, %s12
  %s15 = scalar_select 0, %s14, %s12
  $region1: #{tpu_custom_call.1} parent=0
    #allocation2 [shape = 'u8[24576]{0}', space=vmem, size = 0x6000, scoped, tag = 'input window, operand 0']
    #allocation3 [shape = 's32[2]{0}', space=sflag, size = 0x8, scoped, tag = 'scoped memory for tpu_custom_call.1']
    #allocation4 [shape = 'u8[135168]{0}', space=vmem, size = 0x21000, scoped, tag = 'input window, operand 1, single buffered']
    #allocation5 [shape = 's32[1]{0}', space=sflag, size = 0x4, scoped, tag = 'scoped memory for tpu_custom_call.1']
    %16 = vsyncpa [#allocation3], 0
    %s17 = scalar_lea.sflag [#allocation3], 1
    %18 = vsyncpa %s17, 0
    %19 = vsyncpa [#allocation5], 0
    loop: start=0, step=1, limit=6
    $region2: #{tpu_custom_call.1} parent=1 // loop_pre_header
      _
    $region3: #{tpu_custom_call.1} parent=1 // loop_header
      %s21 = sphi 0, %s25
      %p22 = scmp.ge.s32.totalorder %s21, 6
      %s31 = sphi 0, %s33
      %s34 = sphi 0, %s31
      %s35 = sphi 0, %s34
      %s51 = sphi 0, %s35
      %s55 = sphi 0, %s55
      %s57 = sphi 0, %s55
      %s58 = sphi 0, %s57
      %s72 = sphi 0, %s58
      %s76 = sphi 0, %s76
      %s78 = sphi 0, %s76
      %s79 = sphi 0, %s78
      %s93 = sphi 0, %s79
      %s97 = sphi 0, %s97
      %s99 = sphi 0, %s97
      %s100 = sphi 0, %s99
      %s114 = sphi 0, %s100
      %s118 = sphi 0, %s118
      %s120 = sphi 0, %s118
      %s121 = sphi 0, %s120
      %s135 = sphi 0, %s121
      %s139 = sphi 0, %s139
      %s141 = sphi 0, %s139
      %s142 = sphi 0, %s141
      %s156 = sphi 0, %s142
      %s160 = sphi 0, %s160
      %s162 = sphi 0, %s160
      %s163 = sphi 0, %s162
      %s177 = sphi 0, %s163
      %s181 = sphi 0, %s181
      %s183 = sphi 0, %s181
      %s184 = sphi 0, %s183
      %s198 = sphi 0, %s184
      %s202 = sphi 0, %s202
      %s204 = sphi 0, %s202
      %s205 = sphi 0, %s204
      %s219 = sphi 0, %s205
      %s223 = sphi 0, %s223
      %s225 = sphi 0, %s223
      %s226 = sphi 0, %s225
      %s240 = sphi 0, %s226
      %s244 = sphi 0, %s244
      %s246 = sphi 0, %s244
      %s247 = sphi 0, %s246
      %s261 = sphi 0, %s247
      %s267 = sphi 0, %s269
      %s270 = sphi 0, %s267
      %s271 = sphi 0, %s270
      %s287 = sphi 0, %s271
    $region4: #{tpu_custom_call.1} parent=1 // loop_header_branch
      %24 = sbr.rel (%p22) target = $region8
    $region5: #{tpu_custom_call.1} parent=1 // loop_body
      %s26 = ssub.s32 %s21, 1
      %s27 = ssub.s32 %s21, 2
      %s28 = sadd.s32 %s21, 1
      %s29 = ssub.s32 %s21, %s28
      %p30 = scmp.eq.s32.totalorder %s29, 0
      %s32 = sadd.s32 %s31, 1
      %s33 = scalar_select %p30, %s31, %s32
      %p36 = pneg %p30
      %p37 = scmp.eq.s32.totalorder %s21, 3
      %p38 = por %p36, %p37
      %p39 = scmp.ne.s32.totalorder %s31, %s34
      %p40 = scmp.eq.s32.totalorder %s21, 0
      %p41 = por %p39, %p40
      %p42 = scmp.ne.s32.totalorder %s31, %s34
      %p43 = scmp.eq.s32.totalorder %s26, 3
      %p44 = por %p42, %p43
      %p45 = scmp.ne.s32.totalorder %s34, %s35
      %p46 = scmp.eq.s32.totalorder %s26, 0
      %p47 = por %p45, %p46
      %p48 = scmp.ne.s32.totalorder %s34, %s35
      %p49 = scmp.eq.s32.totalorder %s27, 3
      %p50 = por %p48, %p49
      %p52 = scmp.ne.s32.totalorder %s35, %s51
      %p53 = scmp.eq.s32.totalorder %s27, 0
      %p54 = por %p52, %p53
      %s56 = sadd.s32 %s55, 1
      %p59 = scmp.eq.s32.totalorder %s21, 3
      %p60 = scmp.ne.s32.totalorder %s55, %s57
      %p61 = scmp.eq.s32.totalorder %s21, 0
      %p62 = por %p60, %p61
      %p63 = scmp.ne.s32.totalorder %s55, %s57
      %p64 = scmp.eq.s32.totalorder %s26, 3
      %p65 = por %p63, %p64
      %p66 = scmp.ne.s32.totalorder %s57, %s58
      %p67 = scmp.eq.s32.totalorder %s26, 0
      %p68 = por %p66, %p67
      %p69 = scmp.ne.s32.totalorder %s57, %s58
      %p70 = scmp.eq.s32.totalorder %s27, 3
      %p71 = por %p69, %p70
      %p73 = scmp.ne.s32.totalorder %s58, %s72
      %p74 = scmp.eq.s32.totalorder %s27, 0
      %p75 = por %p73, %p74
      %s77 = sadd.s32 %s76, 1
      %p80 = scmp.eq.s32.totalorder %s21, 3
      %p81 = scmp.ne.s32.totalorder %s76, %s78
      %p82 = scmp.eq.s32.totalorder %s21, 0
      %p83 = por %p81, %p82
      %p84 = scmp.ne.s32.totalorder %s76, %s78
      %p85 = scmp.eq.s32.totalorder %s26, 3
      %p86 = por %p84, %p85
      %p87 = scmp.ne.s32.totalorder %s78, %s79
      %p88 = scmp.eq.s32.totalorder %s26, 0
      %p89 = por %p87, %p88
      %p90 = scmp.ne.s32.totalorder %s78, %s79
      %p91 = scmp.eq.s32.totalorder %s27, 3
      %p92 = por %p90, %p91
      %p94 = scmp.ne.s32.totalorder %s79, %s93
      %p95 = scmp.eq.s32.totalorder %s27, 0
      %p96 = por %p94, %p95
      %s98 = sadd.s32 %s97, 1
      %p101 = scmp.eq.s32.totalorder %s21, 3
      %p102 = scmp.ne.s32.totalorder %s97, %s99
      %p103 = scmp.eq.s32.totalorder %s21, 0
      %p104 = por %p102, %p103
      %p105 = scmp.ne.s32.totalorder %s97, %s99
      %p106 = scmp.eq.s32.totalorder %s26, 3
      %p107 = por %p105, %p106
      %p108 = scmp.ne.s32.totalorder %s99, %s100
      %p109 = scmp.eq.s32.totalorder %s26, 0
      %p110 = por %p108, %p109
      %p111 = scmp.ne.s32.totalorder %s99, %s100
      %p112 = scmp.eq.s32.totalorder %s27, 3
      %p113 = por %p111, %p112
      %p115 = scmp.ne.s32.totalorder %s100, %s114
      %p116 = scmp.eq.s32.totalorder %s27, 0
      %p117 = por %p115, %p116
      %s119 = sadd.s32 %s118, 1
      %p122 = scmp.eq.s32.totalorder %s21, 3
      %p123 = scmp.ne.s32.totalorder %s118, %s120
      %p124 = scmp.eq.s32.totalorder %s21, 0
      %p125 = por %p123, %p124
      %p126 = scmp.ne.s32.totalorder %s118, %s120
      %p127 = scmp.eq.s32.totalorder %s26, 3
      %p128 = por %p126, %p127
      %p129 = scmp.ne.s32.totalorder %s120, %s121
      %p130 = scmp.eq.s32.totalorder %s26, 0
      %p131 = por %p129, %p130
      %p132 = scmp.ne.s32.totalorder %s120, %s121
      %p133 = scmp.eq.s32.totalorder %s27, 3
      %p134 = por %p132, %p133
      %p136 = scmp.ne.s32.totalorder %s121, %s135
      %p137 = scmp.eq.s32.totalorder %s27, 0
      %p138 = por %p136, %p137
      %s140 = sadd.s32 %s139, 1
      %p143 = scmp.eq.s32.totalorder %s21, 3
      %p144 = scmp.ne.s32.totalorder %s139, %s141
      %p145 = scmp.eq.s32.totalorder %s21, 0
      %p146 = por %p144, %p145
      %p147 = scmp.ne.s32.totalorder %s139, %s141
      %p148 = scmp.eq.s32.totalorder %s26, 3
      %p149 = por %p147, %p148
      %p150 = scmp.ne.s32.totalorder %s141, %s142
      %p151 = scmp.eq.s32.totalorder %s26, 0
      %p152 = por %p150, %p151
      %p153 = scmp.ne.s32.totalorder %s141, %s142
      %p154 = scmp.eq.s32.totalorder %s27, 3
      %p155 = por %p153, %p154
      %p157 = scmp.ne.s32.totalorder %s142, %s156
      %p158 = scmp.eq.s32.totalorder %s27, 0
      %p159 = por %p157, %p158
      %s161 = sadd.s32 %s160, 1
      %p164 = scmp.eq.s32.totalorder %s21, 3
      %p165 = scmp.ne.s32.totalorder %s160, %s162
      %p166 = scmp.eq.s32.totalorder %s21, 0
      %p167 = por %p165, %p166
      %p168 = scmp.ne.s32.totalorder %s160, %s162
      %p169 = scmp.eq.s32.totalorder %s26, 3
      %p170 = por %p168, %p169
      %p171 = scmp.ne.s32.totalorder %s162, %s163
      %p172 = scmp.eq.s32.totalorder %s26, 0
      %p173 = por %p171, %p172
      %p174 = scmp.ne.s32.totalorder %s162, %s163
      %p175 = scmp.eq.s32.totalorder %s27, 3
      %p176 = por %p174, %p175
      %p178 = scmp.ne.s32.totalorder %s163, %s177
      %p179 = scmp.eq.s32.totalorder %s27, 0
      %p180 = por %p178, %p179
      %s182 = sadd.s32 %s181, 1
      %p185 = scmp.eq.s32.totalorder %s21, 3
      %p186 = scmp.ne.s32.totalorder %s181, %s183
      %p187 = scmp.eq.s32.totalorder %s21, 0
      %p188 = por %p186, %p187
      %p189 = scmp.ne.s32.totalorder %s181, %s183
      %p190 = scmp.eq.s32.totalorder %s26, 3
      %p191 = por %p189, %p190
      %p192 = scmp.ne.s32.totalorder %s183, %s184
      %p193 = scmp.eq.s32.totalorder %s26, 0
      %p194 = por %p192, %p193
      %p195 = scmp.ne.s32.totalorder %s183, %s184
      %p196 = scmp.eq.s32.totalorder %s27, 3
      %p197 = por %p195, %p196
      %p199 = scmp.ne.s32.totalorder %s184, %s198
      %p200 = scmp.eq.s32.totalorder %s27, 0
      %p201 = por %p199, %p200
      %s203 = sadd.s32 %s202, 1
      %p206 = scmp.eq.s32.totalorder %s21, 3
      %p207 = scmp.ne.s32.totalorder %s202, %s204
      %p208 = scmp.eq.s32.totalorder %s21, 0
      %p209 = por %p207, %p208
      %p210 = scmp.ne.s32.totalorder %s202, %s204
      %p211 = scmp.eq.s32.totalorder %s26, 3
      %p212 = por %p210, %p211
      %p213 = scmp.ne.s32.totalorder %s204, %s205
      %p214 = scmp.eq.s32.totalorder %s26, 0
      %p215 = por %p213, %p214
      %p216 = scmp.ne.s32.totalorder %s204, %s205
      %p217 = scmp.eq.s32.totalorder %s27, 3
      %p218 = por %p216, %p217
      %p220 = scmp.ne.s32.totalorder %s205, %s219
      %p221 = scmp.eq.s32.totalorder %s27, 0
      %p222 = por %p220, %p221
      %s224 = sadd.s32 %s223, 1
      %p227 = scmp.eq.s32.totalorder %s21, 3
      %p228 = scmp.ne.s32.totalorder %s223, %s225
      %p229 = scmp.eq.s32.totalorder %s21, 0
      %p230 = por %p228, %p229
      %p231 = scmp.ne.s32.totalorder %s223, %s225
      %p232 = scmp.eq.s32.totalorder %s26, 3
      %p233 = por %p231, %p232
      %p234 = scmp.ne.s32.totalorder %s225, %s226
      %p235 = scmp.eq.s32.totalorder %s26, 0
      %p236 = por %p234, %p235
      %p237 = scmp.ne.s32.totalorder %s225, %s226
      %p238 = scmp.eq.s32.totalorder %s27, 3
      %p239 = por %p237, %p238
      %p241 = scmp.ne.s32.totalorder %s226, %s240
      %p242 = scmp.eq.s32.totalorder %s27, 0
      %p243 = por %p241, %p242
      %s245 = sadd.s32 %s244, 1
      %p248 = scmp.eq.s32.totalorder %s21, 3
      %p249 = scmp.ne.s32.totalorder %s244, %s246
      %p250 = scmp.eq.s32.totalorder %s21, 0
      %p251 = por %p249, %p250
      %p252 = scmp.ne.s32.totalorder %s244, %s246
      %p253 = scmp.eq.s32.totalorder %s26, 3
      %p254 = por %p252, %p253
      %p255 = scmp.ne.s32.totalorder %s246, %s247
      %p256 = scmp.eq.s32.totalorder %s26, 0
      %p257 = por %p255, %p256
      %p258 = scmp.ne.s32.totalorder %s246, %s247
      %p259 = scmp.eq.s32.totalorder %s27, 3
      %p260 = por %p258, %p259
      %p262 = scmp.ne.s32.totalorder %s247, %s261
      %p263 = scmp.eq.s32.totalorder %s27, 0
      %p264 = por %p262, %p263
      %s265 = ssub.s32 %s21, %s28
      %p266 = scmp.eq.s32.totalorder %s265, 0
      %s268 = sadd.s32 %s267, 1
      %s269 = scalar_select %p266, %s267, %s268
      %p272 = pneg %p266
      %p273 = scmp.eq.s32.totalorder %s21, 3
      %p274 = por %p272, %p273
      %p275 = scmp.ne.s32.totalorder %s267, %s270
      %p276 = scmp.eq.s32.totalorder %s21, 0
      %p277 = por %p275, %p276
      %p278 = scmp.ne.s32.totalorder %s267, %s270
      %p279 = scmp.eq.s32.totalorder %s26, 3
      %p280 = por %p278, %p279
      %p281 = scmp.ne.s32.totalorder %s270, %s271
      %p282 = scmp.eq.s32.totalorder %s26, 0
      %p283 = por %p281, %p282
      %p284 = scmp.ne.s32.totalorder %s270, %s271
      %p285 = scmp.eq.s32.totalorder %s27, 3
      %p286 = por %p284, %p285
      %p288 = scmp.ne.s32.totalorder %s271, %s287
      %p289 = scmp.eq.s32.totalorder %s27, 0
      %p290 = por %p288, %p289
      %p291 = scmp.le.s32.totalorder 1, %s21
      %p292 = scmp.lt.s32.totalorder %s21, 5
      %p293 = pnand %p291, %p292
      %p294 = pneg %p293
      // Predicated region
      $region9: #{tpu_custom_call.1} parent=5 // pred_check
        _
      $region10: #{tpu_custom_call.1} parent=5 // pred_check_branch
        %296 = sbr.rel (%p293) target = $region12
      $region11: #{tpu_custom_call.1} parent=5 // pred_region
        %s297 = ssub.s32 %s21, 1
        // Predicated region
        $region13: #{tpu_custom_call.1} parent=11 // pred_check
          %p298 = pneg %p68
        $region14: #{tpu_custom_call.1} parent=11 // pred_check_branch
          %300 = sbr.rel (%p298) target = $region16
        $region15: #{tpu_custom_call.1} parent=11 // pred_region
          %302 = vsyncadd [#allocation5], 0
          %s303 = sshll.u32 %s1, 4
          %s304 = int_to_ptr.hbm [resolvable:$true] %s303
          %s305 = sshll.u32 [#allocation4], 4
          %s306 = int_to_ptr.vmem [resolvable:$true] %s305
          %311 = dma.hbm_to_vmem [thread:$0]  %s304, 4224, %s306, [#allocation5], 128, 128, 8
        $region16: #{tpu_custom_call.1} parent=11 // pred_fallthru
          _
        // Predicated region
        $region17: #{tpu_custom_call.1} parent=11 // pred_check
          %p312 = pneg %p89
        $region18: #{tpu_custom_call.1} parent=11 // pred_check_branch
          %314 = sbr.rel (%p312) target = $region20
        $region19: #{tpu_custom_call.1} parent=11 // pred_region
          _
        $region20: #{tpu_custom_call.1} parent=11 // pred_fallthru
          _
        // Predicated region
        $region21: #{tpu_custom_call.1} parent=11 // pred_check
          %p315 = pneg %p110
        $region22: #{tpu_custom_call.1} parent=11 // pred_check_branch
          %317 = sbr.rel (%p315) target = $region24
        $region23: #{tpu_custom_call.1} parent=11 // pred_region
          _
        $region24: #{tpu_custom_call.1} parent=11 // pred_fallthru
          _
        // Predicated region
        $region25: #{tpu_custom_call.1} parent=11 // pred_check
          %p318 = pneg %p131
        $region26: #{tpu_custom_call.1} parent=11 // pred_check_branch
          %320 = sbr.rel (%p318) target = $region28
        $region27: #{tpu_custom_call.1} parent=11 // pred_region
          _
        $region28: #{tpu_custom_call.1} parent=11 // pred_fallthru
          _
        // Predicated region
        $region29: #{tpu_custom_call.1} parent=11 // pred_check
          %p321 = pneg %p152
        $region30: #{tpu_custom_call.1} parent=11 // pred_check_branch
          %323 = sbr.rel (%p321) target = $region32
        $region31: #{tpu_custom_call.1} parent=11 // pred_region
          _
        $region32: #{tpu_custom_call.1} parent=11 // pred_fallthru
          _
        // Predicated region
        $region33: #{tpu_custom_call.1} parent=11 // pred_check
          %p324 = pneg %p173
        $region34: #{tpu_custom_call.1} parent=11 // pred_check_branch
          %326 = sbr.rel (%p324) target = $region36
        $region35: #{tpu_custom_call.1} parent=11 // pred_region
          _
        $region36: #{tpu_custom_call.1} parent=11 // pred_fallthru
          _
        // Predicated region
        $region37: #{tpu_custom_call.1} parent=11 // pred_check
          %p327 = pneg %p194
        $region38: #{tpu_custom_call.1} parent=11 // pred_check_branch
          %329 = sbr.rel (%p327) target = $region40
        $region39: #{tpu_custom_call.1} parent=11 // pred_region
          _
        $region40: #{tpu_custom_call.1} parent=11 // pred_fallthru
          _
        // Predicated region
        $region41: #{tpu_custom_call.1} parent=11 // pred_check
          %p330 = pneg %p215
        $region42: #{tpu_custom_call.1} parent=11 // pred_check_branch
          %332 = sbr.rel (%p330) target = $region44
        $region43: #{tpu_custom_call.1} parent=11 // pred_region
          _
        $region44: #{tpu_custom_call.1} parent=11 // pred_fallthru
          _
        // Predicated region
        $region45: #{tpu_custom_call.1} parent=11 // pred_check
          %p333 = pneg %p236
        $region46: #{tpu_custom_call.1} parent=11 // pred_check_branch
          %335 = sbr.rel (%p333) target = $region48
        $region47: #{tpu_custom_call.1} parent=11 // pred_region
          _
        $region48: #{tpu_custom_call.1} parent=11 // pred_fallthru
          _
        // Predicated region
        $region49: #{tpu_custom_call.1} parent=11 // pred_check
          %p336 = pneg %p257
        $region50: #{tpu_custom_call.1} parent=11 // pred_check_branch
          %338 = sbr.rel (%p336) target = $region52
        $region51: #{tpu_custom_call.1} parent=11 // pred_region
          _
        $region52: #{tpu_custom_call.1} parent=11 // pred_fallthru
          _
      $region12: #{tpu_custom_call.1} parent=5 // pred_fallthru
        _
      %p339 = scmp.lt.s32.totalorder %s21, 4
      // Predicated region
      $region53: #{tpu_custom_call.1} parent=5 // pred_check
        %p340 = pneg %p339
      $region54: #{tpu_custom_call.1} parent=5 // pred_check_branch
        %342 = sbr.rel (%p340) target = $region56
      $region55: #{tpu_custom_call.1} parent=5 // pred_region
        // Predicated region
        $region57: #{tpu_custom_call.1} parent=55 // pred_check
          %p343 = pneg %p41
        $region58: #{tpu_custom_call.1} parent=55 // pred_check_branch
          %345 = sbr.rel (%p343) target = $region60
        $region59: #{tpu_custom_call.1} parent=55 // pred_region
          %s346 = sand.u32 %s31, 1
          %s347 = scalar_lea.sflag [#allocation3], %s346
          %s348 = sand.u32 %s31, 1
          %s349 = smul.addr %s348, 24
          %s350 = scalar_lea.vmem [#allocation2], %s349
          %s351 = smul.u32 2, %s21
          %353 = vsyncadd %s347, 0
          %s354 = smul.addr %s351, 3
          %s355 = smul.addr %s354, 4
          %s356 = scalar_lea.hbm %s0, %s355
          %s357 = sshll.u32 %s356, 4
          %s358 = int_to_ptr.hbm [resolvable:$true] %s357
          %s359 = sshll.u32 %s350, 4
          %s360 = int_to_ptr.vmem [resolvable:$true] %s359
          %365 = dma.hbm_to_vmem [thread:$0]  %s358, 384, %s360, %s347, 192, 192, 12
        $region60: #{tpu_custom_call.1} parent=55 // pred_fallthru
          _
      $region56: #{tpu_custom_call.1} parent=5 // pred_fallthru
        _
      %p366 = scmp.le.s32.totalorder 1, %s21
      %p367 = scmp.lt.s32.totalorder %s21, 5
      %p368 = pnand %p366, %p367
      %p369 = pneg %p368
      // Predicated region
      $region61: #{tpu_custom_call.1} parent=5 // pred_check
        _
      $region62: #{tpu_custom_call.1} parent=5 // pred_check_branch
        %371 = sbr.rel (%p368) target = $region64
      $region63: #{tpu_custom_call.1} parent=5 // pred_region
        %s372 = ssub.s32 %s21, 1
        %s373 = sand.u32 %s34, 1
        %s374 = scalar_lea.sflag [#allocation3], %s373
        %s375 = sand.u32 %s34, 1
        %s376 = smul.addr %s375, 24
        %s377 = scalar_lea.vmem [#allocation2], %s376
        // Predicated region
        $region65: #{tpu_custom_call.1} parent=63 // pred_check
          %p378 = pneg %p47
        $region66: #{tpu_custom_call.1} parent=63 // pred_check_branch
          %380 = sbr.rel (%p378) target = $region68
        $region67: #{tpu_custom_call.1} parent=63 // pred_region
          %382 = dma.done %s374, 384
        $region68: #{tpu_custom_call.1} parent=63 // pred_fallthru
          _
        // Predicated region
        $region69: #{tpu_custom_call.1} parent=63 // pred_check
          %p383 = pneg %p68
        $region70: #{tpu_custom_call.1} parent=63 // pred_check_branch
          %385 = sbr.rel (%p383) target = $region72
        $region71: #{tpu_custom_call.1} parent=63 // pred_region
          %387 = dma.done [#allocation5], 4224
        $region72: #{tpu_custom_call.1} parent=63 // pred_fallthru
          _
        %s388 = sand.u32 %s34, 1
        %s389 = scalar_lea.sflag [#allocation3], %s388
        %s390 = sand.u32 %s34, 1
        %s391 = smul.addr %s390, 24
        %s392 = scalar_lea.vmem [#allocation2], %s391
        %p393 = pneg %p47
        %p394 = pneg %p44
        %p395 = pneg %p68
        %p396 = pneg %p65
        %p397 = pneg %p89
        %p398 = pneg %p86
        %p399 = pneg %p110
        %p400 = pneg %p107
        %p401 = pneg %p131
        %p402 = pneg %p128
        %p403 = pneg %p152
        %p404 = pneg %p149
        %p405 = pneg %p173
        %p406 = pneg %p170
        %p407 = pneg %p194
        %p408 = pneg %p191
        %p409 = pneg %p215
        %p410 = pneg %p212
        %p411 = pneg %p236
        %p412 = pneg %p233
        %p413 = pneg %p257
        %p414 = pneg %p254
        %p415 = pneg %p283
        %p416 = pneg %p280
        %s417 = smul.u32 2, %s26
        %p418 = scmp.lt.s32.totalorder %s417, 7
        %s419 = scalar_select %p418, %s417, 7
        %s420 = smul.addr %s419, 8
        %s421 = scalar_lea.vmem %s11, %s420
        %s422 = smul.u32 2, %s26
        %s423 = smul.u32 2, %s26
        %p424 = scmp.lt.s32.totalorder %s423, 7
        %s425 = scalar_select %p424, %s423, 7
        %s426 = smul.addr %s425, 8
        %s427 = scalar_lea.vmem %s11, %s426
        %s428 = smul.u32 2, %s26
        %v430 = vld [vmem:[%s377] sm:$0xff]
        %v431 = vld [vmem:[%s377 + $0x8] sm:$0xf]
        %v432 = vld [vmem:[%s377 + $0xc] sm:$0xff]
        %v433 = vld [vmem:[%s377 + $0x14] sm:$0xf]
        %v434 = vld [vmem:[#allocation4] sm:$0xff]
        %v435 = vld [vmem:[#allocation4 + $0x8] sm:$0xff]
        %v436 = vld [vmem:[#allocation4 + $0x10] sm:$0xff]
        %v437 = vld [vmem:[#allocation4 + $0x18] sm:$0xff]
        %v438 = vld [vmem:[#allocation4 + $0x20] sm:$0xff]
        %v439 = vld [vmem:[#allocation4 + $0x28] sm:$0xff]
        %v440 = vld [vmem:[#allocation4 + $0x30] sm:$0xff]
        %v441 = vld [vmem:[#allocation4 + $0x38] sm:$0xff]
        %v442 = vld [vmem:[#allocation4 + $0x40] sm:$0xff]
        %v443 = vld [vmem:[#allocation4 + $0x48] sm:$0xff]
        %v444 = vld [vmem:[#allocation4 + $0x50] sm:$0xff]
        %v445 = vld [vmem:[#allocation4 + $0x58] sm:$0xff]
        %v446 = vld [vmem:[#allocation4 + $0x60] sm:$0xff]
        %v447 = vld [vmem:[#allocation4 + $0x68] sm:$0xff]
        %v448 = vld [vmem:[#allocation4 + $0x70] sm:$0xff]
        %v449 = vld [vmem:[#allocation4 + $0x78] sm:$0xff]
        %v450 = vld [vmem:[#allocation4 + $0x80] sm:$0xff]
        %v451 = vld [vmem:[#allocation4 + $0x88] sm:$0xff]
        %v452 = vld [vmem:[#allocation4 + $0x90] sm:$0xff]
        %v453 = vld [vmem:[#allocation4 + $0x98] sm:$0xff]
        %v454 = vld [vmem:[#allocation4 + $0xa0] sm:$0xff]
        %v455 = vld [vmem:[#allocation4 + $0xa8] sm:$0xff]
        %v456 = vld [vmem:[#allocation4 + $0xb0] sm:$0xff]
        %v457 = vld [vmem:[#allocation4 + $0xb8] sm:$0xff]
        %v458 = vld [vmem:[#allocation4 + $0xc0] sm:$0xff]
        %v459 = vld [vmem:[#allocation4 + $0xc8] sm:$0xff]
        %v460 = vld [vmem:[#allocation4 + $0xd0] sm:$0xff]
        %v461 = vld [vmem:[#allocation4 + $0xd8] sm:$0xff]
        %v462 = vld [vmem:[#allocation4 + $0xe0] sm:$0xff]
        %v463 = vld [vmem:[#allocation4 + $0xe8] sm:$0xff]
        %v464 = vld [vmem:[#allocation4 + $0xf0] sm:$0xff]
        %v465 = vld [vmem:[#allocation4 + $0xf8] sm:$0xff]
        %v466 = vld [vmem:[#allocation4 + $0x100] sm:$0x33]
        %v467 = vld [vmem:[%s2] sm:$0x3]
        %v469 = vperm.slane %v467, 0
        %v470 = vperm.slane %v467, 1
        %v477 = vunpack.c.l.b16 %v430
        %v478 = vunpack.c.h.b16 %v430
        %v479 = vunpack.c.l.b16 %v431
        %v480 = vunpack.c.l.b16 %v432
        %v481 = vunpack.c.h.b16 %v432
        %v482 = vunpack.c.l.b16 %v433
        %v483 = vpack.c.b16 %v480, %v477
        %v484 = vpack.c.b16 %v481, %v478
        %v485 = vpack.c.b16 %v482, %v479
        %v521 = vunpack.c.l.b16 %v434
        %v522 = vunpack.c.h.b16 %v434
        %v523 = vunpack.c.l.b16 %v435
        %v524 = vunpack.c.h.b16 %v435
        %v525 = vunpack.c.l.b16 %v436
        %v526 = vunpack.c.h.b16 %v436
        %v527 = vunpack.c.l.b16 %v437
        %v528 = vunpack.c.h.b16 %v437
        %v529 = vunpack.c.l.b16 %v438
        %v530 = vunpack.c.h.b16 %v438
        %v531 = vunpack.c.l.b16 %v439
        %v532 = vunpack.c.h.b16 %v439
        %v533 = vunpack.c.l.b16 %v440
        %v534 = vunpack.c.h.b16 %v440
        %v535 = vunpack.c.l.b16 %v441
        %v536 = vunpack.c.h.b16 %v441
        %v537 = vunpack.c.l.b16 %v442
        %v538 = vunpack.c.h.b16 %v442
        %v539 = vunpack.c.l.b16 %v443
        %v540 = vunpack.c.h.b16 %v443
        %v541 = vunpack.c.l.b16 %v444
        %v542 = vunpack.c.h.b16 %v444
        %v543 = vunpack.c.l.b16 %v445
        %v544 = vunpack.c.h.b16 %v445
        %v545 = vunpack.c.l.b16 %v446
        %v546 = vunpack.c.h.b16 %v446
        %v547 = vunpack.c.l.b16 %v447
        %v548 = vunpack.c.h.b16 %v447
        %v549 = vunpack.c.l.b16 %v448
        %v550 = vunpack.c.h.b16 %v448
        %v551 = vunpack.c.l.b16 %v449
        %v552 = vunpack.c.h.b16 %v449
        %v553 = vunpack.c.l.b16 %v450
        %v554 = vunpack.c.h.b16 %v450
        %v555 = vunpack.c.l.b16 %v451
        %v556 = vunpack.c.h.b16 %v451
        %v557 = vunpack.c.l.b16 %v452
        %v558 = vunpack.c.h.b16 %v452
        %v559 = vunpack.c.l.b16 %v453
        %v560 = vunpack.c.h.b16 %v453
        %v561 = vunpack.c.l.b16 %v454
        %v562 = vunpack.c.h.b16 %v454
        %v563 = vunpack.c.l.b16 %v455
        %v564 = vunpack.c.h.b16 %v455
        %v565 = vunpack.c.l.b16 %v456
        %v566 = vunpack.c.h.b16 %v456
        %v567 = vunpack.c.l.b16 %v457
        %v568 = vunpack.c.h.b16 %v457
        %v569 = vunpack.c.l.b16 %v458
        %v570 = vunpack.c.h.b16 %v458
        %v571 = vunpack.c.l.b16 %v459
        %v572 = vunpack.c.h.b16 %v459
        %v573 = vunpack.c.l.b16 %v460
        %v574 = vunpack.c.h.b16 %v460
        %v575 = vunpack.c.l.b16 %v461
        %v576 = vunpack.c.h.b16 %v461
        %v577 = vunpack.c.l.b16 %v462
        %v578 = vunpack.c.h.b16 %v462
        %v579 = vunpack.c.l.b16 %v463
        %v580 = vunpack.c.h.b16 %v463
        %v581 = vunpack.c.l.b16 %v464
        %v582 = vunpack.c.h.b16 %v464
        %v583 = vunpack.c.l.b16 %v465
        %v584 = vunpack.c.h.b16 %v465
        %v585 = vunpack.c.l.b16 %v466
        %v586 = vunpack.c.h.b16 %v466
        %v587 = vpack.c.b16 %v523, %v521
        %v588 = vpack.c.b16 %v524, %v522
        %v589 = vpack.c.b16 %v527, %v525
        %v590 = vpack.c.b16 %v528, %v526
        %v591 = vpack.c.b16 %v531, %v529
        %v592 = vpack.c.b16 %v532, %v530
        %v593 = vpack.c.b16 %v535, %v533
        %v594 = vpack.c.b16 %v536, %v534
        %v595 = vpack.c.b16 %v539, %v537
        %v596 = vpack.c.b16 %v540, %v538
        %v597 = vpack.c.b16 %v543, %v541
        %v598 = vpack.c.b16 %v544, %v542
        %v599 = vpack.c.b16 %v547, %v545
        %v600 = vpack.c.b16 %v548, %v546
        %v601 = vpack.c.b16 %v551, %v549
        %v602 = vpack.c.b16 %v552, %v550
        %v603 = vpack.c.b16 %v555, %v553
        %v604 = vpack.c.b16 %v556, %v554
        %v605 = vpack.c.b16 %v559, %v557
        %v606 = vpack.c.b16 %v560, %v558
        %v607 = vpack.c.b16 %v563, %v561
        %v608 = vpack.c.b16 %v564, %v562
        %v609 = vpack.c.b16 %v567, %v565
        %v610 = vpack.c.b16 %v568, %v566
        %v611 = vpack.c.b16 %v571, %v569
        %v612 = vpack.c.b16 %v572, %v570
        %v613 = vpack.c.b16 %v575, %v573
        %v614 = vpack.c.b16 %v576, %v574
        %v615 = vpack.c.b16 %v579, %v577
        %v616 = vpack.c.b16 %v580, %v578
        %v617 = vpack.c.b16 %v583, %v581
        %v618 = vpack.c.b16 %v584, %v582
        %v619 = vpack.c.b16 %v585, %v585
        %v620 = vpack.c.b16 %v586, %v586
        %vm653 = vcmask 31744
        %v655 = vsel %vm653, %v485, 0
        %vm657 = vcmask 1041408
        %v659 = vsel %vm657, %v619, 0
        %v662 = vsel %vm657, %v620, 0
        %664 = vmatpush.bf16.msra.mxu0 %v601
        %665 = vmatpush.bf16.msra.mxu0 %v599
        %666 = vmatpush.bf16.msra.mxu0 %v597
        %667 = vmatpush.bf16.msra.mxu0 %v595
        %668 = vmatpush.bf16.msra.mxu0 %v593
        %669 = vmatpush.bf16.msra.mxu0 %v591
        %670 = vmatpush.bf16.msra.mxu0 %v589
        %671 = vmatpush.bf16.msra.mxu0 %v587
        %672 = vmatmul.bf16.gmra.mxu0 %v483
        %v673 = vpop.f32.mrf.mxu0
        %v674 = vadd.f32 %v469, %v673
        %v675 = vpop.f32.mrf.mxu0
        %v676 = vadd.f32 %v469, %v675
        %677 = vdwg.mxu0
        %678 = vmatpush.bf16.msra.mxu0 %v617
        %679 = vmatpush.bf16.msra.mxu0 %v615
        %680 = vmatpush.bf16.msra.mxu0 %v613
        %681 = vmatpush.bf16.msra.mxu0 %v611
        %682 = vmatpush.bf16.msra.mxu0 %v609
        %683 = vmatpush.bf16.msra.mxu0 %v607
        %684 = vmatpush.bf16.msra.mxu0 %v605
        %685 = vmatpush.bf16.msra.mxu0 %v603
        %686 = vmatmul.bf16.gmra.mxu0 %v484
        %v687 = vpop.f32.mrf.mxu0
        %v688 = vadd.f32 %v674, %v687
        %v689 = vpop.f32.mrf.mxu0
        %v690 = vadd.f32 %v676, %v689
        %691 = vdwg.mxu0
        %692 = vmatpush.bf16.msra.mxu0 0
        %693 = vmatpush.bf16.msra.mxu0 0
        %694 = vmatpush.bf16.msra.mxu0 0
        %695 = vmatpush.bf16.msra.mxu0 0
        %696 = vmatpush.bf16.msra.mxu0 0
        %697 = vmatpush.bf16.msra.mxu0 0
        %698 = vmatpush.bf16.msra.mxu0 0
        %699 = vmatpush.bf16.msra.mxu0 %v659
        %700 = vmatmul.bf16.gmra.mxu0 %v655
        %v701 = vpop.f32.mrf.mxu0
        %v702 = vadd.f32 %v688, %v701
        %v703 = vpop.f32.mrf.mxu0
        %v704 = vadd.f32 %v690, %v703
        %705 = vdwg.mxu0
        %706 = vmatpush.bf16.msra.mxu0 %v602
        %707 = vmatpush.bf16.msra.mxu0 %v600
        %708 = vmatpush.bf16.msra.mxu0 %v598
        %709 = vmatpush.bf16.msra.mxu0 %v596
        %710 = vmatpush.bf16.msra.mxu0 %v594
        %711 = vmatpush.bf16.msra.mxu0 %v592
        %712 = vmatpush.bf16.msra.mxu0 %v590
        %713 = vmatpush.bf16.msra.mxu0 %v588
        %714 = vmatmul.bf16.gmra.mxu0 %v483
        %v715 = vpop.f32.mrf.mxu0
        %v716 = vadd.f32 %v470, %v715
        %v717 = vpop.f32.mrf.mxu0
        %v718 = vadd.f32 %v470, %v717
        %719 = vdwg.mxu0
        %720 = vmatpush.bf16.msra.mxu0 %v618
        %721 = vmatpush.bf16.msra.mxu0 %v616
        %722 = vmatpush.bf16.msra.mxu0 %v614
        %723 = vmatpush.bf16.msra.mxu0 %v612
        %724 = vmatpush.bf16.msra.mxu0 %v610
        %725 = vmatpush.bf16.msra.mxu0 %v608
        %726 = vmatpush.bf16.msra.mxu0 %v606
        %727 = vmatpush.bf16.msra.mxu0 %v604
        %728 = vmatmul.bf16.gmra.mxu0 %v484
        %v729 = vpop.f32.mrf.mxu0
        %v730 = vadd.f32 %v716, %v729
        %v731 = vpop.f32.mrf.mxu0
        %v732 = vadd.f32 %v718, %v731
        %733 = vdwg.mxu0
        %734 = vmatpush.bf16.msra.mxu0 0
        %735 = vmatpush.bf16.msra.mxu0 0
        %736 = vmatpush.bf16.msra.mxu0 0
        %737 = vmatpush.bf16.msra.mxu0 0
        %738 = vmatpush.bf16.msra.mxu0 0
        %739 = vmatpush.bf16.msra.mxu0 0
        %740 = vmatpush.bf16.msra.mxu0 0
        %741 = vmatpush.bf16.msra.mxu0 %v662
        %742 = vmatmul.bf16.gmra.mxu0 %v655
        %v743 = vpop.f32.mrf.mxu0
        %v744 = vadd.f32 %v730, %v743
        %v745 = vpop.f32.mrf.mxu0
        %v746 = vadd.f32 %v732, %v745
        %747 = vdwg.mxu0
        %v748 = vmax.f32 %v702, 0.0
        %v749 = vmax.f32 %v744, 0.0
        %v750 = vmax.f32 %v704, 0.0
        %v751 = vmax.f32 %v746, 0.0
        %v752 = vpack.c.bf16 %v750, %v748
        %v753 = vpack.c.bf16 %v751, %v749
        %v754 = vld [vmem:[%s3] sm:$0xf]
        %v755 = vld [vmem:[%s3 + $0x4] sm:$0xf]
        %v756 = vld [vmem:[%s3 + $0x8] sm:$0xf]
        %v757 = vld [vmem:[%s3 + $0xc] sm:$0xf]
        %v758 = vld [vmem:[%s3 + $0x10] sm:$0xf]
        %v759 = vld [vmem:[%s3 + $0x14] sm:$0xf]
        %v760 = vld [vmem:[%s3 + $0x18] sm:$0xf]
        %v761 = vld [vmem:[%s3 + $0x1c] sm:$0xf]
        %v762 = vld [vmem:[%s3 + $0x20] sm:$0xf]
        %v763 = vld [vmem:[%s3 + $0x24] sm:$0xf]
        %v764 = vld [vmem:[%s3 + $0x28] sm:$0xf]
        %v765 = vld [vmem:[%s3 + $0x2c] sm:$0xf]
        %v766 = vld [vmem:[%s3 + $0x30] sm:$0xf]
        %v767 = vld [vmem:[%s3 + $0x34] sm:$0xf]
        %v768 = vld [vmem:[%s3 + $0x38] sm:$0xf]
        %v769 = vld [vmem:[%s3 + $0x3c] sm:$0xf]
        %v770 = vld [vmem:[%s3 + $0x40] sm:$0xf]
        %v771 = vld [vmem:[%s3 + $0x44] sm:$0xf]
        %v772 = vld [vmem:[%s3 + $0x48] sm:$0xf]
        %v773 = vld [vmem:[%s3 + $0x4c] sm:$0xf]
        %v774 = vld [vmem:[%s3 + $0x50] sm:$0xf]
        %v775 = vld [vmem:[%s3 + $0x54] sm:$0xf]
        %v776 = vld [vmem:[%s3 + $0x58] sm:$0xf]
        %v777 = vld [vmem:[%s3 + $0x5c] sm:$0xf]
        %v778 = vld [vmem:[%s3 + $0x60] sm:$0xf]
        %v779 = vld [vmem:[%s3 + $0x64] sm:$0xf]
        %v780 = vld [vmem:[%s3 + $0x68] sm:$0xf]
        %v781 = vld [vmem:[%s3 + $0x6c] sm:$0xf]
        %v782 = vld [vmem:[%s3 + $0x70] sm:$0xf]
        %v783 = vld [vmem:[%s3 + $0x74] sm:$0xf]
        %v784 = vld [vmem:[%s3 + $0x78] sm:$0xf]
        %v785 = vld [vmem:[%s3 + $0x7c] sm:$0xf]
        %v786 = vld [vmem:[%s4] sm:$0x1]
        %v788 = vperm.slane %v786, 0
        %v822 = vunpack.c.l.b16 %v754
        %v823 = vunpack.c.l.b16 %v755
        %v824 = vunpack.c.l.b16 %v756
        %v825 = vunpack.c.l.b16 %v757
        %v826 = vunpack.c.l.b16 %v758
        %v827 = vunpack.c.l.b16 %v759
        %v828 = vunpack.c.l.b16 %v760
        %v829 = vunpack.c.l.b16 %v761
        %v830 = vunpack.c.l.b16 %v762
        %v831 = vunpack.c.l.b16 %v763
        %v832 = vunpack.c.l.b16 %v764
        %v833 = vunpack.c.l.b16 %v765
        %v834 = vunpack.c.l.b16 %v766
        %v835 = vunpack.c.l.b16 %v767
        %v836 = vunpack.c.l.b16 %v768
        %v837 = vunpack.c.l.b16 %v769
        %v838 = vunpack.c.l.b16 %v770
        %v839 = vunpack.c.l.b16 %v771
        %v840 = vunpack.c.l.b16 %v772
        %v841 = vunpack.c.l.b16 %v773
        %v842 = vunpack.c.l.b16 %v774
        %v843 = vunpack.c.l.b16 %v775
        %v844 = vunpack.c.l.b16 %v776
        %v845 = vunpack.c.l.b16 %v777
        %v846 = vunpack.c.l.b16 %v778
        %v847 = vunpack.c.l.b16 %v779
        %v848 = vunpack.c.l.b16 %v780
        %v849 = vunpack.c.l.b16 %v781
        %v850 = vunpack.c.l.b16 %v782
        %v851 = vunpack.c.l.b16 %v783
        %v852 = vunpack.c.l.b16 %v784
        %v853 = vunpack.c.l.b16 %v785
        %v854 = vpack.c.b16 %v823, %v822
        %v855 = vpack.c.b16 %v825, %v824
        %v856 = vpack.c.b16 %v827, %v826
        %v857 = vpack.c.b16 %v829, %v828
        %v858 = vpack.c.b16 %v831, %v830
        %v859 = vpack.c.b16 %v833, %v832
        %v860 = vpack.c.b16 %v835, %v834
        %v861 = vpack.c.b16 %v837, %v836
        %v862 = vpack.c.b16 %v839, %v838
        %v863 = vpack.c.b16 %v841, %v840
        %v864 = vpack.c.b16 %v843, %v842
        %v865 = vpack.c.b16 %v845, %v844
        %v866 = vpack.c.b16 %v847, %v846
        %v867 = vpack.c.b16 %v849, %v848
        %v868 = vpack.c.b16 %v851, %v850
        %v869 = vpack.c.b16 %v853, %v852
        %886 = vmatpush.bf16.msra.mxu0 %v861
        %887 = vmatpush.bf16.msra.mxu0 %v860
        %888 = vmatpush.bf16.msra.mxu0 %v859
        %889 = vmatpush.bf16.msra.mxu0 %v858
        %890 = vmatpush.bf16.msra.mxu0 %v857
        %891 = vmatpush.bf16.msra.mxu0 %v856
        %892 = vmatpush.bf16.msra.mxu0 %v855
        %893 = vmatpush.bf16.msra.mxu0 %v854
        %894 = vmatmul.bf16.gmra.mxu0 %v752
        %v895 = vpop.f32.mrf.mxu0
        %v896 = vadd.f32 %v788, %v895
        %v897 = vpop.f32.mrf.mxu0
        %v898 = vadd.f32 %v788, %v897
        %899 = vdwg.mxu0
        %900 = vmatpush.bf16.msra.mxu0 %v869
        %901 = vmatpush.bf16.msra.mxu0 %v868
        %902 = vmatpush.bf16.msra.mxu0 %v867
        %903 = vmatpush.bf16.msra.mxu0 %v866
        %904 = vmatpush.bf16.msra.mxu0 %v865
        %905 = vmatpush.bf16.msra.mxu0 %v864
        %906 = vmatpush.bf16.msra.mxu0 %v863
        %907 = vmatpush.bf16.msra.mxu0 %v862
        %908 = vmatmul.bf16.gmra.mxu0 %v753
        %v909 = vpop.f32.mrf.mxu0
        %v910 = vadd.f32 %v896, %v909
        %v911 = vpop.f32.mrf.mxu0
        %v912 = vadd.f32 %v898, %v911
        %913 = vdwg.mxu0
        %v914 = vmax.f32 %v910, 0.0
        %v915 = vmax.f32 %v912, 0.0
        %v916 = vpack.c.bf16 %v915, %v914
        %v917 = vld [vmem:[%s5] sm:$0xf]
        %v918 = vld [vmem:[%s5 + $0x4] sm:$0xf]
        %v919 = vld [vmem:[%s5 + $0x8] sm:$0xf]
        %v920 = vld [vmem:[%s5 + $0xc] sm:$0xf]
        %v921 = vld [vmem:[%s5 + $0x10] sm:$0xf]
        %v922 = vld [vmem:[%s5 + $0x14] sm:$0xf]
        %v923 = vld [vmem:[%s5 + $0x18] sm:$0xf]
        %v924 = vld [vmem:[%s5 + $0x1c] sm:$0xf]
        %v925 = vld [vmem:[%s5 + $0x20] sm:$0xf]
        %v926 = vld [vmem:[%s5 + $0x24] sm:$0xf]
        %v927 = vld [vmem:[%s5 + $0x28] sm:$0xf]
        %v928 = vld [vmem:[%s5 + $0x2c] sm:$0xf]
        %v929 = vld [vmem:[%s5 + $0x30] sm:$0xf]
        %v930 = vld [vmem:[%s5 + $0x34] sm:$0xf]
        %v931 = vld [vmem:[%s5 + $0x38] sm:$0xf]
        %v932 = vld [vmem:[%s5 + $0x3c] sm:$0xf]
        %v933 = vld [vmem:[%s6] sm:$0x1]
        %v935 = vperm.slane %v933, 0
        %v953 = vunpack.c.l.b16 %v917
        %v954 = vunpack.c.l.b16 %v918
        %v955 = vunpack.c.l.b16 %v919
        %v956 = vunpack.c.l.b16 %v920
        %v957 = vunpack.c.l.b16 %v921
        %v958 = vunpack.c.l.b16 %v922
        %v959 = vunpack.c.l.b16 %v923
        %v960 = vunpack.c.l.b16 %v924
        %v961 = vunpack.c.l.b16 %v925
        %v962 = vunpack.c.l.b16 %v926
        %v963 = vunpack.c.l.b16 %v927
        %v964 = vunpack.c.l.b16 %v928
        %v965 = vunpack.c.l.b16 %v929
        %v966 = vunpack.c.l.b16 %v930
        %v967 = vunpack.c.l.b16 %v931
        %v968 = vunpack.c.l.b16 %v932
        %v969 = vpack.c.b16 %v954, %v953
        %v970 = vpack.c.b16 %v956, %v955
        %v971 = vpack.c.b16 %v958, %v957
        %v972 = vpack.c.b16 %v960, %v959
        %v973 = vpack.c.b16 %v962, %v961
        %v974 = vpack.c.b16 %v964, %v963
        %v975 = vpack.c.b16 %v966, %v965
        %v976 = vpack.c.b16 %v968, %v967
        %985 = vmatpush.bf16.msra.mxu0 %v976
        %986 = vmatpush.bf16.msra.mxu0 %v975
        %987 = vmatpush.bf16.msra.mxu0 %v974
        %988 = vmatpush.bf16.msra.mxu0 %v973
        %989 = vmatpush.bf16.msra.mxu0 %v972
        %990 = vmatpush.bf16.msra.mxu0 %v971
        %991 = vmatpush.bf16.msra.mxu0 %v970
        %992 = vmatpush.bf16.msra.mxu0 %v969
        %993 = vmatmul.bf16.gmra.mxu0 %v916
        %v994 = vpop.f32.mrf.mxu0
        %v995 = vadd.f32 %v935, %v994
        %v996 = vpop.f32.mrf.mxu0
        %v997 = vadd.f32 %v935, %v996
        %998 = vdwg.mxu0
        %v999 = vmax.f32 %v995, 0.0
        %v1000 = vmax.f32 %v997, 0.0
        %v1001 = vpack.c.bf16 %v1000, %v999
        %v1002 = vld [vmem:[%s7] sm:$0xf]
        %v1003 = vld [vmem:[%s7 + $0x4] sm:$0xf]
        %v1004 = vld [vmem:[%s7 + $0x8] sm:$0xf]
        %v1005 = vld [vmem:[%s7 + $0xc] sm:$0xf]
        %v1006 = vld [vmem:[%s7 + $0x10] sm:$0xf]
        %v1007 = vld [vmem:[%s7 + $0x14] sm:$0xf]
        %v1008 = vld [vmem:[%s7 + $0x18] sm:$0xf]
        %v1009 = vld [vmem:[%s7 + $0x1c] sm:$0xf]
        %v1010 = vld [vmem:[%s8] sm:$0x1]
        %v1012 = vperm.slane %v1010, 0
        %v1022 = vunpack.c.l.b16 %v1002
        %v1023 = vunpack.c.l.b16 %v1003
        %v1024 = vunpack.c.l.b16 %v1004
        %v1025 = vunpack.c.l.b16 %v1005
        %v1026 = vunpack.c.l.b16 %v1006
        %v1027 = vunpack.c.l.b16 %v1007
        %v1028 = vunpack.c.l.b16 %v1008
        %v1029 = vunpack.c.l.b16 %v1009
        %v1030 = vpack.c.b16 %v1023, %v1022
        %v1031 = vpack.c.b16 %v1025, %v1024
        %v1032 = vpack.c.b16 %v1027, %v1026
        %v1033 = vpack.c.b16 %v1029, %v1028
        %vm1038 = vcmask 523264
        %v1040 = vsel %vm1038, %v1001, 0
        %1042 = vmatpush.bf16.msra.mxu0 0
        %1043 = vmatpush.bf16.msra.mxu0 0
        %1044 = vmatpush.bf16.msra.mxu0 0
        %1045 = vmatpush.bf16.msra.mxu0 0
        %1046 = vmatpush.bf16.msra.mxu0 %v1033
        %1047 = vmatpush.bf16.msra.mxu0 %v1032
        %1048 = vmatpush.bf16.msra.mxu0 %v1031
        %1049 = vmatpush.bf16.msra.mxu0 %v1030
        %1050 = vmatmul.bf16.gmra.mxu0 %v1040
        %v1051 = vpop.f32.mrf.mxu0
        %v1052 = vadd.f32 %v1012, %v1051
        %v1053 = vpop.f32.mrf.mxu0
        %v1054 = vadd.f32 %v1012, %v1053
        %1055 = vdwg.mxu0
        %v1056 = vmax.f32 %v1052, 0.0
        %v1057 = vmax.f32 %v1054, 0.0
        %v1058 = vpack.c.bf16 %v1057, %v1056
        %v1059 = vld [vmem:[%s9] sm:$0xf]
        %v1060 = vld [vmem:[%s9 + $0x4] sm:$0xf]
        %v1061 = vld [vmem:[%s9 + $0x8] sm:$0xf]
        %v1062 = vld [vmem:[%s9 + $0xc] sm:$0xf]
        %v1063 = vld [vmem:[%s10] sm:$0x1]
        %v1065 = vperm.slane %v1063, 0
        %v1071 = vunpack.c.l.b16 %v1059
        %v1072 = vunpack.c.l.b16 %v1060
        %v1073 = vunpack.c.l.b16 %v1061
        %v1074 = vunpack.c.l.b16 %v1062
        %v1075 = vpack.c.b16 %v1072, %v1071
        %v1076 = vpack.c.b16 %v1074, %v1073
        %vm1079 = vcmask 261120
        %v1081 = vsel %vm1079, %v1058, 0
        %1083 = vmatpush.bf16.msra.mxu0 0
        %1084 = vmatpush.bf16.msra.mxu0 0
        %1085 = vmatpush.bf16.msra.mxu0 0
        %1086 = vmatpush.bf16.msra.mxu0 0
        %1087 = vmatpush.bf16.msra.mxu0 0
        %1088 = vmatpush.bf16.msra.mxu0 0
        %1089 = vmatpush.bf16.msra.mxu0 %v1076
        %1090 = vmatpush.bf16.msra.mxu0 %v1075
        %1091 = vmatmul.bf16.gmra.mxu0 %v1081
        %v1092 = vpop.f32.mrf.mxu0
        %v1093 = vadd.f32 %v1065, %v1092
        %v1094 = vpop.f32.mrf.mxu0
        %v1095 = vadd.f32 %v1065, %v1094
        %1096 = vdwg.mxu0
        %v1097 = vmax.f32 %v1093, 0.0
        %v1098 = vmax.f32 %v1095, 0.0
        %1099 = vst.msk [vmem:[%s427] sm:$0xff] %vm1079, %v1097
        %1100 = vst.msk [vmem:[%s427 + $0x8] sm:$0xff] %vm1079, %v1098
        %s1101 = smul.u32 2, %s26
        %p1102 = scmp.lt.s32.totalorder %s1101, 7
        %s1103 = scalar_select %p1102, %s1101, 7
        %s1104 = smul.addr %s1103, 8
        %s1105 = scalar_lea.vmem %s11, %s1104
        // Predicated region
        $region73: #{tpu_custom_call.1} parent=63 // pred_check
          %p1106 = pneg %p280
        $region74: #{tpu_custom_call.1} parent=63 // pred_check_branch
          %1108 = sbr.rel (%p1106) target = $region76
        $region75: #{tpu_custom_call.1} parent=63 // pred_region
          %s1109 = smul.u32 2, %s26
        $region76: #{tpu_custom_call.1} parent=63 // pred_fallthru
          _
      $region64: #{tpu_custom_call.1} parent=5 // pred_fallthru
        _
      %p1110 = scmp.le.s32.totalorder 2, %s21
      // Predicated region
      $region77: #{tpu_custom_call.1} parent=5 // pred_check
        %p1111 = pneg %p1110
      $region78: #{tpu_custom_call.1} parent=5 // pred_check_branch
        %1113 = sbr.rel (%p1111) target = $region80
      $region79: #{tpu_custom_call.1} parent=5 // pred_region
        %s1114 = ssub.s32 %s21, 2
        // Predicated region
        $region81: #{tpu_custom_call.1} parent=79 // pred_check
          %p1115 = pneg %p286
        $region82: #{tpu_custom_call.1} parent=79 // pred_check_branch
          %1117 = sbr.rel (%p1115) target = $region84
        $region83: #{tpu_custom_call.1} parent=79 // pred_region
          %s1118 = smul.u32 2, %s27
          %p1119 = scmp.lt.s32.totalorder %s1118, 7
          %s1120 = scalar_select %p1119, %s1118, 7
          %s1121 = smul.addr %s1120, 8
          %s1122 = scalar_lea.vmem %s11, %s1121
        $region84: #{tpu_custom_call.1} parent=79 // pred_fallthru
          _
      $region80: #{tpu_custom_call.1} parent=5 // pred_fallthru
        _
    $region6: #{tpu_custom_call.1} parent=1 // loop_footer
      %s25 = sadd.s32 1, %s21
    $region7: #{tpu_custom_call.1} parent=1 // loop_footer_branch
      %20 = sbr.rel target = $region3
    $region8: #{tpu_custom_call.1} parent=1 // loop_exit
      _
    %1123 = vsyncpa [#allocation3], 1
    %s1124 = scalar_lea.sflag [#allocation3], 1
    %1125 = vsyncpa %s1124, 1
    %1126 = vsyncpa [#allocation5], 1

</llo_original>
